<compile_context>
chip_gen: v5e
topology: v5e:2x2
jax: 0.10.0
libtpu: 0.0.40
codegen_flags: <defaults>
</compile_context>

<pallas_src>
import numpy as np
import jax
import jax.numpy as jnp
from jax import lax
from jax.experimental import pallas as pl
from jax.experimental.pallas import tpu as pltpu

POSTERIOR_SCALE = 1.0
PRIOR_SCALE = 1.0

LANE = 128          # TPU lane width
TILE_B_MAX = 4096   # batch tile (lane axis); ~6 MiB/tile VMEM incl. intermediates


def _round_up(n, m):
    return ((n + m - 1) // m) * m


def _net_kernel(x_ref, z_ref, w1x_ref, b1x_ref, w1z_ref, b1z_ref,
                w2_ref, b2_ref, out_ref):
    """One batch tile.  Inputs batch-major, activations feature-major.

    x_ref : (TILE_B, in_features)   z_ref : (TILE_B, noise_dim)
    w1x   : (2*h1, in_features)     b1x   : (2*h1, 1)
    w1z   : (2*h2, noise_dim)       b1z   : (2*h2, 1)   (scales folded in)
    w2    : (2*h2, 2*h1) block-diag b2    : (2*h2, 1)
    out   : (1, TILE_B)
    """
    cd = w1x_ref.dtype                        # compute dtype fed to the MXU
    dn = (((1,), (1,)), ((), ()))             # contract feature dim with feature dim

    # Layer 1, x path: result is directly feature-major (2*h1, TILE_B).
    h = lax.dot_general(w1x_ref[...], x_ref[...].astype(cd), dn,
                        preferred_element_type=jnp.float32)
    h = jnp.maximum(h + b1x_ref[...], 0.0)

    # Hyper heads, z path: [posterior_scale*theta ; prior_scale*prior_theta].
    theta = lax.dot_general(w1z_ref[...], z_ref[...].astype(cd), dn,
                            preferred_element_type=jnp.float32)
    theta = theta + b1z_ref[...]

    # Layer 2 (block-diagonal): [logits ; prior_logits], (2*h2, TILE_B).
    l2 = jnp.dot(w2_ref[...], h.astype(cd), preferred_element_type=jnp.float32)
    l2 = jnp.maximum(l2 + b2_ref[...], 0.0)

    prod = l2 * theta                                         # (2*h2, TILE_B)

    # Reduce over the 2*h2 rows on the MXU (ones-row matmul) -> (1, TILE_B),
    # lane-dense unmasked store.
    ones = jnp.ones((1, prod.shape[0]), jnp.float32)
    out_ref[...] = jnp.dot(ones, prod, preferred_element_type=jnp.float32)


@jax.jit
def net_forward(z, x, packed):
    """Whole Net.forward in one fused, batch-tiled Pallas kernel. Returns (B,)."""
    B, in_f = x.shape
    nz = z.shape[1]

    tile_b = min(TILE_B_MAX, _round_up(B, LANE))
    Bp = _round_up(B, tile_b)
    grid = (Bp // tile_b,)

    # Stream inputs in the weight dtype (f32 here; bf16 if packed that way).
    stream_dt = packed["w1x"].dtype
    x = x.astype(stream_dt)
    z = z.astype(stream_dt)
    if Bp != B:
        # Only the ragged tail gets padded; the common large-B case copies nothing.
        x = jnp.pad(x, ((0, Bp - B), (0, 0)))
        z = jnp.pad(z, ((0, Bp - B), (0, 0)))

    resident = lambda a: pl.BlockSpec(a.shape, lambda i: (0, 0))  # stays in VMEM

    out = pl.pallas_call(
        _net_kernel,
        out_shape=jax.ShapeDtypeStruct((1, Bp), jnp.float32),
        grid=grid,
        in_specs=[
            pl.BlockSpec((tile_b, in_f), lambda i: (i, 0)),   # x, batch-major
            pl.BlockSpec((tile_b, nz), lambda i: (i, 0)),     # z, batch-major
            resident(packed["w1x"]),
            resident(packed["b1x"]),
            resident(packed["w1z"]),
            resident(packed["b1z"]),
            resident(packed["w2"]),
            resident(packed["b2"]),
        ],
        out_specs=pl.BlockSpec((1, tile_b), lambda i: (0, i)),
        compiler_params=pltpu.CompilerParams(
            dimension_semantics=("parallel",)),
    )(x, z, packed["w1x"], packed["b1x"], packed["w1z"], packed["b1z"],
      packed["w2"], packed["b2"])

    return out[0, :B]


# ----------------------------------------------------------------------------
# Parameter construction (mirrors the PyTorch module) and offline repacking.
# ----------------------------------------------------------------------------
def init_params(in_features, hidden_sizes, noise_dim, seed=0,
                prior_std=1.0, prior_mean=0.0):
    """Raw per-layer params in PyTorch nn.Linear layout: W is (out, in), b is (out,)."""
    rng = np.random.RandomState(seed)
    h1, h2 = hidden_sizes

    def linear(fan_in, fan_out):
        bound = 1.0 / np.sqrt(fan_in)           # nn.Linear default init
        w = rng.uniform(-bound, bound, size=(fan_out, fan_in)).astype(np.float32)
        b = rng.uniform(-bound, bound, size=(fan_out,)).astype(np.float32)
        return w, b

    w1b, b1b = linear(in_features, h1)          # basedmodel layer 1
    w2b, b2b = linear(h1, h2)                   # basedmodel layer 2
    w1p, b1p = linear(in_features, h1)          # priormodel layer 1 (frozen)
    w2p, b2p = linear(h1, h2)                   # priormodel layer 2 (frozen)
    wh, bh = linear(noise_dim, h2)              # HyperLinear.hypermodel

    # PriorHyperLinear: unit-norm gaussian rows, scaled by prior_std, bias = prior_mean.
    wph = rng.randn(h2, noise_dim).astype(np.float32)
    wph = wph / np.linalg.norm(wph, axis=1, keepdims=True)
    wph = (np.eye(h2, dtype=np.float32) * prior_std) @ wph
    bph = np.ones(h2, dtype=np.float32) * prior_mean

    return dict(w1b=w1b, b1b=b1b, w2b=w2b, b2b=b2b,
                w1p=w1p, b1p=b1p, w2p=w2p, b2p=b2p,
                wh=wh, bh=bh, wph=wph.astype(np.float32), bph=bph)


def pack_params(raw, *, posterior_scale=POSTERIOR_SCALE, prior_scale=PRIOR_SCALE,
                dtype=jnp.float32):
    """One-time repack into the un-fused, feature-major weights used by the kernel.

    x-path layer 1 (2*h1 rows):   [basedmodel hidden ; priormodel hidden]
    z-path heads   (2*h2 rows):   [posterior_scale*theta ; prior_scale*prior_theta]
    layer 2        (2*h2, 2*h1):  block-diagonal [w2b | 0 ; 0 | w2p]
    Biases stay f32 regardless of the weight storage dtype.
    """
    h1 = raw["w1b"].shape[0]
    h2 = raw["w2b"].shape[0]

    w1x = np.concatenate([raw["w1b"], raw["w1p"]], axis=0)            # (2*h1, in_f)
    b1x = np.concatenate([raw["b1b"], raw["b1p"]])[:, None]           # (2*h1, 1)

    w1z = np.concatenate([posterior_scale * raw["wh"],
                          prior_scale * raw["wph"]], axis=0)          # (2*h2, nz)
    b1z = np.concatenate([posterior_scale * raw["bh"],
                          prior_scale * raw["bph"]])[:, None]         # (2*h2, 1)

    w2 = np.zeros((2 * h2, 2 * h1), np.float32)                       # block-diagonal
    w2[:h2, :h1] = raw["w2b"]
    w2[h2:, h1:] = raw["w2p"]
    b2 = np.concatenate([raw["b2b"], raw["b2p"]])[:, None]            # (2*h2, 1)

    return dict(w1x=jnp.asarray(w1x, dtype),
                b1x=jnp.asarray(b1x, jnp.float32),
                w1z=jnp.asarray(w1z, dtype),
                b1z=jnp.asarray(b1z, jnp.float32),
                w2=jnp.asarray(w2, dtype),
                b2=jnp.asarray(b2, jnp.float32))


def net_forward_ref(z, x, raw):
    """Pure-JAX reference in the original, unfused formulation."""
    lin = lambda a, w, b: a @ w.T + b
    logits = jax.nn.relu(lin(jax.nn.relu(lin(x, raw["w1b"], raw["b1b"])),
                             raw["w2b"], raw["b2b"]))
    prior_logits = jax.nn.relu(lin(jax.nn.relu(lin(x, raw["w1p"], raw["b1p"])),
                                   raw["w2p"], raw["b2p"]))
    theta = lin(z, raw["wh"], raw["bh"])
    prior_theta = lin(z, raw["wph"], raw["bph"])
    out = jnp.sum(logits * theta, -1)
    prior_out = jnp.sum(prior_logits * prior_theta, -1)
    return POSTERIOR_SCALE * out + PRIOR_SCALE * prior_out


if __name__ == "__main__":
    B = 8
    IN_FEATURES = 16
    HIDDEN_SIZES = (32, 32)
    NOISE_DIM = 8

    raw = init_params(IN_FEATURES, HIDDEN_SIZES, NOISE_DIM, seed=0)
    packed = pack_params(raw)        # pack_params(raw, dtype=jnp.bfloat16) for bf16 path

    key = jax.random.PRNGKey(0)
    kx, kz = jax.random.split(key)
    x = jax.random.normal(kx, (B, IN_FEATURES), dtype=jnp.float32)
    z = jax.random.normal(kz, (B, NOISE_DIM), dtype=jnp.float32)

    out = net_forward(z, x, packed)
    out = jax.block_until_ready(out)

    ref = net_forward_ref(z, x, {k: jnp.asarray(v) for k, v in raw.items()})
    assert out.shape == (B,)
    np.testing.assert_allclose(np.asarray(out), np.asarray(ref), rtol=2e-4, atol=5e-5)

    # TODO(synk): Net.regularization (theta.pow(2).mean()) is not part of forward
    # and is left to plain JAX if needed.
    print("KERNEL_OK")
</pallas_src>

<mosaic_0001>
module attributes {stable_mosaic.version = 11 : i64} {
  func.func @_net_kernel(%arg0: i32, %arg1: memref<128x16xf32, #tpu.memory_space<vmem>>, %arg2: memref<128x8xf32, #tpu.memory_space<vmem>>, %arg3: memref<64x16xf32, #tpu.memory_space<vmem>>, %arg4: memref<64x1xf32, #tpu.memory_space<vmem>>, %arg5: memref<64x8xf32, #tpu.memory_space<vmem>>, %arg6: memref<64x1xf32, #tpu.memory_space<vmem>>, %arg7: memref<64x64xf32, #tpu.memory_space<vmem>>, %arg8: memref<64x1xf32, #tpu.memory_space<vmem>>, %arg9: memref<1x128xf32, #tpu.memory_space<vmem>>) attributes {dimension_semantics = [#tpu.dimension_semantics<parallel>], iteration_bounds = array<i64: 1>, scalar_prefetch = 0 : i64, scratch_operands = 0 : i64, tpu.core_type = #tpu.core_type<tc>, window_params = [{transform_indices = @transform_0, window_bounds = array<i64: 128, 16>}, {transform_indices = @transform_1, window_bounds = array<i64: 128, 8>}, {pipeline_mode = #tpu.pipeline_mode<synchronous>, transform_indices = @transform_2, window_bounds = array<i64: 64, 16>}, {pipeline_mode = #tpu.pipeline_mode<synchronous>, transform_indices = @transform_3, window_bounds = array<i64: 64, 1>}, {pipeline_mode = #tpu.pipeline_mode<synchronous>, transform_indices = @transform_4, window_bounds = array<i64: 64, 8>}, {pipeline_mode = #tpu.pipeline_mode<synchronous>, transform_indices = @transform_5, window_bounds = array<i64: 64, 1>}, {pipeline_mode = #tpu.pipeline_mode<synchronous>, transform_indices = @transform_6, window_bounds = array<i64: 64, 64>}, {pipeline_mode = #tpu.pipeline_mode<synchronous>, transform_indices = @transform_7, window_bounds = array<i64: 64, 1>}, {transform_indices = @transform_8, window_bounds = array<i64: 1, 128>}]} {
    %c0 = arith.constant 0 : index
    %c0_0 = arith.constant 0 : index
    %0 = vector.load %arg3[%c0, %c0_0] : memref<64x16xf32, #tpu.memory_space<vmem>>, vector<64x16xf32>
    %c0_1 = arith.constant 0 : index
    %c0_2 = arith.constant 0 : index
    %1 = vector.load %arg1[%c0_1, %c0_2] : memref<128x16xf32, #tpu.memory_space<vmem>>, vector<128x16xf32>
    %cst = arith.constant dense<0.000000e+00> : vector<64x128xf32>
    %2 = tpu.matmul %0, %1, %cst {dimension_numbers = #tpu.dot_dimension_numbers<[1], [1], [0], [0], [0, 0, 1, 0], [], []>} : vector<64x16xf32>, vector<128x16xf32>, vector<64x128xf32> -> vector<64x128xf32>
    %c0_3 = arith.constant 0 : index
    %c0_4 = arith.constant 0 : index
    %3 = vector.load %arg4[%c0_3, %c0_4] : memref<64x1xf32, #tpu.memory_space<vmem>>, vector<64x1xf32>
    %4 = vector.broadcast %3 : vector<64x1xf32> to vector<64x128xf32>
    %5 = arith.addf %2, %4 : vector<64x128xf32>
    %cst_5 = arith.constant 0.000000e+00 : f32
    %6 = vector.broadcast %cst_5 : f32 to vector<64x128xf32>
    %7 = arith.maximumf %5, %6 : vector<64x128xf32>
    %c0_6 = arith.constant 0 : index
    %c0_7 = arith.constant 0 : index
    %8 = vector.load %arg5[%c0_6, %c0_7] : memref<64x8xf32, #tpu.memory_space<vmem>>, vector<64x8xf32>
    %c0_8 = arith.constant 0 : index
    %c0_9 = arith.constant 0 : index
    %9 = vector.load %arg2[%c0_8, %c0_9] : memref<128x8xf32, #tpu.memory_space<vmem>>, vector<128x8xf32>
    %cst_10 = arith.constant dense<0.000000e+00> : vector<64x128xf32>
    %10 = tpu.matmul %8, %9, %cst_10 {dimension_numbers = #tpu.dot_dimension_numbers<[1], [1], [0], [0], [0, 0, 1, 0], [], []>} : vector<64x8xf32>, vector<128x8xf32>, vector<64x128xf32> -> vector<64x128xf32>
    %c0_11 = arith.constant 0 : index
    %c0_12 = arith.constant 0 : index
    %11 = vector.load %arg6[%c0_11, %c0_12] : memref<64x1xf32, #tpu.memory_space<vmem>>, vector<64x1xf32>
    %12 = vector.broadcast %11 : vector<64x1xf32> to vector<64x128xf32>
    %13 = arith.addf %10, %12 : vector<64x128xf32>
    %c0_13 = arith.constant 0 : index
    %c0_14 = arith.constant 0 : index
    %14 = vector.load %arg7[%c0_13, %c0_14] : memref<64x64xf32, #tpu.memory_space<vmem>>, vector<64x64xf32>
    %cst_15 = arith.constant dense<0.000000e+00> : vector<64x128xf32>
    %15 = tpu.matmul %14, %7, %cst_15 {dimension_numbers = #tpu.dot_dimension_numbers<[1], [0], [0], [1], [0, 0, 1, 1], [], []>} : vector<64x64xf32>, vector<64x128xf32>, vector<64x128xf32> -> vector<64x128xf32>
    %c0_16 = arith.constant 0 : index
    %c0_17 = arith.constant 0 : index
    %16 = vector.load %arg8[%c0_16, %c0_17] : memref<64x1xf32, #tpu.memory_space<vmem>>, vector<64x1xf32>
    %17 = vector.broadcast %16 : vector<64x1xf32> to vector<64x128xf32>
    %18 = arith.addf %15, %17 : vector<64x128xf32>
    %cst_18 = arith.constant 0.000000e+00 : f32
    %19 = vector.broadcast %cst_18 : f32 to vector<64x128xf32>
    %20 = arith.maximumf %18, %19 : vector<64x128xf32>
    %21 = arith.mulf %20, %13 : vector<64x128xf32>
    %cst_19 = arith.constant 1.000000e+00 : f32
    %22 = vector.broadcast %cst_19 : f32 to vector<1x64xf32>
    %cst_20 = arith.constant dense<0.000000e+00> : vector<1x128xf32>
    %23 = tpu.matmul %22, %21, %cst_20 {dimension_numbers = #tpu.dot_dimension_numbers<[1], [0], [0], [1], [0, 0, 1, 1], [], []>} : vector<1x64xf32>, vector<64x128xf32>, vector<1x128xf32> -> vector<1x128xf32>
    %c0_21 = arith.constant 0 : index
    %c0_22 = arith.constant 0 : index
    %24 = vector.load %arg9[%c0_21, %c0_22] : memref<1x128xf32, #tpu.memory_space<vmem>>, vector<1x128xf32>
    tpu.vector_store %arg9[%c0_21, %c0_22], %23 {strides = array<i32>} : memref<1x128xf32, #tpu.memory_space<vmem>>, vector<1x128xf32>,
    return
  }
  func.func @transform_0(%arg0: i32) -> (i32, i32) {
    %c0_i32 = arith.constant 0 : i32
    %c0_i32_0 = arith.constant 0 : i32
    return %arg0, %c0_i32 : i32, i32
  }
  func.func @transform_1(%arg0: i32) -> (i32, i32) {
    %c0_i32 = arith.constant 0 : i32
    %c0_i32_0 = arith.constant 0 : i32
    return %arg0, %c0_i32 : i32, i32
  }
  func.func @transform_2(%arg0: i32) -> (i32, i32) {
    %c0_i32 = arith.constant 0 : i32
    %c0_i32_0 = arith.constant 0 : i32
    %c0_i32_1 = arith.constant 0 : i32
    return %c0_i32, %c0_i32_0 : i32, i32
  }
  func.func @transform_3(%arg0: i32) -> (i32, i32) {
    %c0_i32 = arith.constant 0 : i32
    %c0_i32_0 = arith.constant 0 : i32
    %c0_i32_1 = arith.constant 0 : i32
    return %c0_i32, %c0_i32_0 : i32, i32
  }
  func.func @transform_4(%arg0: i32) -> (i32, i32) {
    %c0_i32 = arith.constant 0 : i32
    %c0_i32_0 = arith.constant 0 : i32
    %c0_i32_1 = arith.constant 0 : i32
    return %c0_i32, %c0_i32_0 : i32, i32
  }
  func.func @transform_5(%arg0: i32) -> (i32, i32) {
    %c0_i32 = arith.constant 0 : i32
    %c0_i32_0 = arith.constant 0 : i32
    %c0_i32_1 = arith.constant 0 : i32
    return %c0_i32, %c0_i32_0 : i32, i32
  }
  func.func @transform_6(%arg0: i32) -> (i32, i32) {
    %c0_i32 = arith.constant 0 : i32
    %c0_i32_0 = arith.constant 0 : i32
    %c0_i32_1 = arith.constant 0 : i32
    return %c0_i32, %c0_i32_0 : i32, i32
  }
  func.func @transform_7(%arg0: i32) -> (i32, i32) {
    %c0_i32 = arith.constant 0 : i32
    %c0_i32_0 = arith.constant 0 : i32
    %c0_i32_1 = arith.constant 0 : i32
    return %c0_i32, %c0_i32_0 : i32, i32
  }
  func.func @transform_8(%arg0: i32) -> (i32, i32) {
    %c0_i32 = arith.constant 0 : i32
    %c0_i32_0 = arith.constant 0 : i32
    return %c0_i32, %arg0 : i32, i32
  }
}

</mosaic_0001>

<llo_original>
// kernel: net_forward.1
$region0: #{net_forward.1}
  #allocation0 [shape = 'u32[]', space=smem, size = 0x4, offset = 0x4, fixed_abs, tag = 'smem constant byte address 0x4 - core index']
  #allocation1 [shape = 'u32[72,128]{1,0:T(1,128)}', space=vmem, size = 0x9000, scoped, tag = 'internal scratch']
  %s0 = inlined_call_operand.vmem [shape: f32[128,16], index: 0, kind: input, shape index: {}]
  %s1 = inlined_call_operand.vmem [shape: f32[128,8], index: 1, kind: input, shape index: {}]
  %s2 = inlined_call_operand.vmem [shape: f32[64,16], index: 2, kind: input, shape index: {}]
  %s3 = inlined_call_operand.vmem [shape: f32[64,1], index: 3, kind: input, shape index: {}]
  %s4 = inlined_call_operand.vmem [shape: f32[64,8], index: 4, kind: input, shape index: {}]
  %s5 = inlined_call_operand.vmem [shape: f32[64,1], index: 5, kind: input, shape index: {}]
  %s6 = inlined_call_operand.vmem [shape: f32[64,64], index: 6, kind: input, shape index: {}]
  %s7 = inlined_call_operand.vmem [shape: f32[64,1], index: 7, kind: input, shape index: {}]
  %s8 = inlined_call_operand.vmem [shape: f32[1,128], index: 8, kind: output, shape index: {}]
  %s9 = sld [smem:[#allocation0]]
  $region42: #{net_forward.1} parent=0
    _
  %s11 = ssub.s32 1, %s9
  %s12 = scalar_select 0, %s11, %s9
  // Predicated region
  $region2: #{net_forward.1} parent=0 // pred_check
    _
  $region3: #{net_forward.1} parent=0 // pred_check_branch
    %14 = sbr.rel (0) target = $region5
  $region4: #{net_forward.1} parent=0 // pred_region
    _
  $region5: #{net_forward.1} parent=0 // pred_fallthru
    _
  // Predicated region
  $region6: #{net_forward.1} parent=0 // pred_check
    _
  $region7: #{net_forward.1} parent=0 // pred_check_branch
    %16 = sbr.rel (0) target = $region9
  $region8: #{net_forward.1} parent=0 // pred_region
    _
  $region9: #{net_forward.1} parent=0 // pred_fallthru
    _
  // Predicated region
  $region10: #{net_forward.1} parent=0 // pred_check
    _
  $region11: #{net_forward.1} parent=0 // pred_check_branch
    %18 = sbr.rel (0) target = $region13
  $region12: #{net_forward.1} parent=0 // pred_region
    _
  $region13: #{net_forward.1} parent=0 // pred_fallthru
    _
  // Predicated region
  $region14: #{net_forward.1} parent=0 // pred_check
    _
  $region15: #{net_forward.1} parent=0 // pred_check_branch
    %20 = sbr.rel (0) target = $region17
  $region16: #{net_forward.1} parent=0 // pred_region
    _
  $region17: #{net_forward.1} parent=0 // pred_fallthru
    _
  // Predicated region
  $region18: #{net_forward.1} parent=0 // pred_check
    _
  $region19: #{net_forward.1} parent=0 // pred_check_branch
    %22 = sbr.rel (0) target = $region21
  $region20: #{net_forward.1} parent=0 // pred_region
    _
  $region21: #{net_forward.1} parent=0 // pred_fallthru
    _
  // Predicated region
  $region22: #{net_forward.1} parent=0 // pred_check
    _
  $region23: #{net_forward.1} parent=0 // pred_check_branch
    %24 = sbr.rel (0) target = $region25
  $region24: #{net_forward.1} parent=0 // pred_region
    _
  $region25: #{net_forward.1} parent=0 // pred_fallthru
    _
  // Predicated region
  $region26: #{net_forward.1} parent=0 // pred_check
    _
  $region27: #{net_forward.1} parent=0 // pred_check_branch
    %26 = sbr.rel (0) target = $region29
  $region28: #{net_forward.1} parent=0 // pred_region
    _
  $region29: #{net_forward.1} parent=0 // pred_fallthru
    _
  // Predicated region
  $region30: #{net_forward.1} parent=0 // pred_check
    _
  $region31: #{net_forward.1} parent=0 // pred_check_branch
    %28 = sbr.rel (0) target = $region33
  $region32: #{net_forward.1} parent=0 // pred_region
    _
  $region33: #{net_forward.1} parent=0 // pred_fallthru
    _
  %v29 = vld [vmem:[%s2] sm:$0xff]
  %v30 = vld [vmem:[%s2 + $0x8] sm:$0xff]
  %v31 = vld [vmem:[%s2 + $0x10] sm:$0xff]
  %v32 = vld [vmem:[%s2 + $0x18] sm:$0xff]
  %v33 = vld [vmem:[%s2 + $0x20] sm:$0xff]
  %v34 = vld [vmem:[%s2 + $0x28] sm:$0xff]
  %v35 = vld [vmem:[%s2 + $0x30] sm:$0xff]
  %v36 = vld [vmem:[%s2 + $0x38] sm:$0xff]
  %v37 = vld [vmem:[%s0] sm:$0xff]
  %v38 = vld [vmem:[%s0 + $0x8] sm:$0xff]
  %v39 = vld [vmem:[%s0 + $0x10] sm:$0xff]
  %v40 = vld [vmem:[%s0 + $0x18] sm:$0xff]
  %v41 = vld [vmem:[%s0 + $0x20] sm:$0xff]
  %v42 = vld [vmem:[%s0 + $0x28] sm:$0xff]
  %v43 = vld [vmem:[%s0 + $0x30] sm:$0xff]
  %v44 = vld [vmem:[%s0 + $0x38] sm:$0xff]
  %v45 = vld [vmem:[%s0 + $0x40] sm:$0xff]
  %v46 = vld [vmem:[%s0 + $0x48] sm:$0xff]
  %v47 = vld [vmem:[%s0 + $0x50] sm:$0xff]
  %v48 = vld [vmem:[%s0 + $0x58] sm:$0xff]
  %v49 = vld [vmem:[%s0 + $0x60] sm:$0xff]
  %v50 = vld [vmem:[%s0 + $0x68] sm:$0xff]
  %v51 = vld [vmem:[%s0 + $0x70] sm:$0xff]
  %v52 = vld [vmem:[%s0 + $0x78] sm:$0xff]
  %v53 = vld [vmem:[%s3] sm:$0xff]
  %v54 = vld [vmem:[%s3 + $0x8] sm:$0xff]
  %v55 = vld [vmem:[%s3 + $0x10] sm:$0xff]
  %v56 = vld [vmem:[%s3 + $0x18] sm:$0xff]
  %v57 = vld [vmem:[%s3 + $0x20] sm:$0xff]
  %v58 = vld [vmem:[%s3 + $0x28] sm:$0xff]
  %v59 = vld [vmem:[%s3 + $0x30] sm:$0xff]
  %v60 = vld [vmem:[%s3 + $0x38] sm:$0xff]
  %62 = vset.pattern.permute.xlu0 0
  %63 = vperm.xlu0 %62, %v53
  %v64 = vpop.permute.xlu0 %63
  %67 = vset.pattern.permute.xlu0 0
  %68 = vperm.xlu0 %67, %v54
  %v69 = vpop.permute.xlu0 %68
  %72 = vset.pattern.permute.xlu0 0
  %73 = vperm.xlu0 %72, %v55
  %v74 = vpop.permute.xlu0 %73
  %77 = vset.pattern.permute.xlu0 0
  %78 = vperm.xlu0 %77, %v56
  %v79 = vpop.permute.xlu0 %78
  %82 = vset.pattern.permute.xlu0 0
  %83 = vperm.xlu0 %82, %v57
  %v84 = vpop.permute.xlu0 %83
  %87 = vset.pattern.permute.xlu0 0
  %88 = vperm.xlu0 %87, %v58
  %v89 = vpop.permute.xlu0 %88
  %92 = vset.pattern.permute.xlu0 0
  %93 = vperm.xlu0 %92, %v59
  %v94 = vpop.permute.xlu0 %93
  %97 = vset.pattern.permute.xlu0 0
  %98 = vperm.xlu0 %97, %v60
  %v99 = vpop.permute.xlu0 %98
  %vm101 = vcmask 130048
  %v103 = vsel %vm101, %v29, 0
  %v106 = vsel %vm101, %v30, 0
  %v109 = vsel %vm101, %v31, 0
  %v112 = vsel %vm101, %v32, 0
  %v115 = vsel %vm101, %v33, 0
  %v118 = vsel %vm101, %v34, 0
  %v121 = vsel %vm101, %v35, 0
  %v124 = vsel %vm101, %v36, 0
  %v127 = vsel %vm101, %v37, 0
  %v130 = vsel %vm101, %v38, 0
  %v133 = vsel %vm101, %v39, 0
  %v136 = vsel %vm101, %v40, 0
  %v139 = vsel %vm101, %v41, 0
  %v142 = vsel %vm101, %v42, 0
  %v145 = vsel %vm101, %v43, 0
  %v148 = vsel %vm101, %v44, 0
  %v151 = vsel %vm101, %v45, 0
  %v154 = vsel %vm101, %v46, 0
  %v157 = vsel %vm101, %v47, 0
  %v160 = vsel %vm101, %v48, 0
  %v163 = vsel %vm101, %v49, 0
  %v166 = vsel %vm101, %v50, 0
  %v169 = vsel %vm101, %v51, 0
  %v172 = vsel %vm101, %v52, 0
  %174 = vmatpush.xpose.msra.mxu0 %v172
  %175 = vmatpush.xpose.msra.mxu0 %v169
  %176 = vmatpush.xpose.msra.mxu0 %v166
  %177 = vmatpush.xpose.msra.mxu0 %v163
  %178 = vmatpush.xpose.msra.mxu0 %v160
  %179 = vmatpush.xpose.msra.mxu0 %v157
  %180 = vmatpush.xpose.msra.mxu0 %v154
  %181 = vmatpush.xpose.msra.mxu0 %v151
  %182 = vmatpush.xpose.msra.mxu0 %v148
  %183 = vmatpush.xpose.msra.mxu0 %v145
  %184 = vmatpush.xpose.msra.mxu0 %v142
  %185 = vmatpush.xpose.msra.mxu0 %v139
  %186 = vmatpush.xpose.msra.mxu0 %v136
  %187 = vmatpush.xpose.msra.mxu0 %v133
  %188 = vmatpush.xpose.msra.mxu0 %v130
  %189 = vmatpush.xpose.msra.mxu0 %v127
  %190 = vmatmul.f32.gmra.mxu0 %v103
  %v191 = vpop.f32.mrf.mxu0
  %v192 = vadd.f32 %v64, %v191
  %193 = vmatmul.f32.gmra.mxu0 %v106
  %v194 = vpop.f32.mrf.mxu0
  %v195 = vadd.f32 %v69, %v194
  %196 = vmatmul.f32.gmra.mxu0 %v109
  %v197 = vpop.f32.mrf.mxu0
  %v198 = vadd.f32 %v74, %v197
  %199 = vmatmul.f32.gmra.mxu0 %v112
  %v200 = vpop.f32.mrf.mxu0
  %v201 = vadd.f32 %v79, %v200
  %202 = vmatmul.f32.gmra.mxu0 %v115
  %v203 = vpop.f32.mrf.mxu0
  %v204 = vadd.f32 %v84, %v203
  %205 = vmatmul.f32.gmra.mxu0 %v118
  %v206 = vpop.f32.mrf.mxu0
  %v207 = vadd.f32 %v89, %v206
  %208 = vmatmul.f32.gmra.mxu0 %v121
  %v209 = vpop.f32.mrf.mxu0
  %v210 = vadd.f32 %v94, %v209
  %211 = vmatmul.f32.gmra.mxu0 %v124
  %v212 = vpop.f32.mrf.mxu0
  %v213 = vadd.f32 %v99, %v212
  %214 = vdwg.mxu0
  %v215 = vmax.f32 %v192, 0.0
  %v216 = vmax.f32 %v195, 0.0
  %v217 = vmax.f32 %v198, 0.0
  %v218 = vmax.f32 %v201, 0.0
  %v219 = vmax.f32 %v204, 0.0
  %v220 = vmax.f32 %v207, 0.0
  %v221 = vmax.f32 %v210, 0.0
  %v222 = vmax.f32 %v213, 0.0
  %v223 = vld [vmem:[%s4] sm:$0xff]
  %v224 = vld [vmem:[%s4 + $0x8] sm:$0xff]
  %v225 = vld [vmem:[%s4 + $0x10] sm:$0xff]
  %v226 = vld [vmem:[%s4 + $0x18] sm:$0xff]
  %v227 = vld [vmem:[%s4 + $0x20] sm:$0xff]
  %v228 = vld [vmem:[%s4 + $0x28] sm:$0xff]
  %v229 = vld [vmem:[%s4 + $0x30] sm:$0xff]
  %v230 = vld [vmem:[%s4 + $0x38] sm:$0xff]
  %v231 = vld [vmem:[%s1] sm:$0xff]
  %v232 = vld [vmem:[%s1 + $0x8] sm:$0xff]
  %v233 = vld [vmem:[%s1 + $0x10] sm:$0xff]
  %v234 = vld [vmem:[%s1 + $0x18] sm:$0xff]
  %v235 = vld [vmem:[%s1 + $0x20] sm:$0xff]
  %v236 = vld [vmem:[%s1 + $0x28] sm:$0xff]
  %v237 = vld [vmem:[%s1 + $0x30] sm:$0xff]
  %v238 = vld [vmem:[%s1 + $0x38] sm:$0xff]
  %v239 = vld [vmem:[%s1 + $0x40] sm:$0xff]
  %v240 = vld [vmem:[%s1 + $0x48] sm:$0xff]
  %v241 = vld [vmem:[%s1 + $0x50] sm:$0xff]
  %v242 = vld [vmem:[%s1 + $0x58] sm:$0xff]
  %v243 = vld [vmem:[%s1 + $0x60] sm:$0xff]
  %v244 = vld [vmem:[%s1 + $0x68] sm:$0xff]
  %v245 = vld [vmem:[%s1 + $0x70] sm:$0xff]
  %v246 = vld [vmem:[%s1 + $0x78] sm:$0xff]
  %v247 = vld [vmem:[%s5] sm:$0xff]
  %v248 = vld [vmem:[%s5 + $0x8] sm:$0xff]
  %v249 = vld [vmem:[%s5 + $0x10] sm:$0xff]
  %v250 = vld [vmem:[%s5 + $0x18] sm:$0xff]
  %v251 = vld [vmem:[%s5 + $0x20] sm:$0xff]
  %v252 = vld [vmem:[%s5 + $0x28] sm:$0xff]
  %v253 = vld [vmem:[%s5 + $0x30] sm:$0xff]
  %v254 = vld [vmem:[%s5 + $0x38] sm:$0xff]
  %256 = vset.pattern.permute.xlu0 0
  %257 = vperm.xlu0 %256, %v247
  %v258 = vpop.permute.xlu0 %257
  %261 = vset.pattern.permute.xlu0 0
  %262 = vperm.xlu0 %261, %v248
  %v263 = vpop.permute.xlu0 %262
  %266 = vset.pattern.permute.xlu0 0
  %267 = vperm.xlu0 %266, %v249
  %v268 = vpop.permute.xlu0 %267
  %271 = vset.pattern.permute.xlu0 0
  %272 = vperm.xlu0 %271, %v250
  %v273 = vpop.permute.xlu0 %272
  %276 = vset.pattern.permute.xlu0 0
  %277 = vperm.xlu0 %276, %v251
  %v278 = vpop.permute.xlu0 %277
  %281 = vset.pattern.permute.xlu0 0
  %282 = vperm.xlu0 %281, %v252
  %v283 = vpop.permute.xlu0 %282
  %286 = vset.pattern.permute.xlu0 0
  %287 = vperm.xlu0 %286, %v253
  %v288 = vpop.permute.xlu0 %287
  %291 = vset.pattern.permute.xlu0 0
  %292 = vperm.xlu0 %291, %v254
  %v293 = vpop.permute.xlu0 %292
  %vm295 = vcmask 64512
  %v297 = vsel %vm295, %v223, 0
  %v300 = vsel %vm295, %v224, 0
  %v303 = vsel %vm295, %v225, 0
  %v306 = vsel %vm295, %v226, 0
  %v309 = vsel %vm295, %v227, 0
  %v312 = vsel %vm295, %v228, 0
  %v315 = vsel %vm295, %v229, 0
  %v318 = vsel %vm295, %v230, 0
  %v321 = vsel %vm295, %v231, 0
  %v324 = vsel %vm295, %v232, 0
  %v327 = vsel %vm295, %v233, 0
  %v330 = vsel %vm295, %v234, 0
  %v333 = vsel %vm295, %v235, 0
  %v336 = vsel %vm295, %v236, 0
  %v339 = vsel %vm295, %v237, 0
  %v342 = vsel %vm295, %v238, 0
  %v345 = vsel %vm295, %v239, 0
  %v348 = vsel %vm295, %v240, 0
  %v351 = vsel %vm295, %v241, 0
  %v354 = vsel %vm295, %v242, 0
  %v357 = vsel %vm295, %v243, 0
  %v360 = vsel %vm295, %v244, 0
  %v363 = vsel %vm295, %v245, 0
  %v366 = vsel %vm295, %v246, 0
  %368 = vmatpush.xpose.msra.mxu0 %v366
  %369 = vmatpush.xpose.msra.mxu0 %v363
  %370 = vmatpush.xpose.msra.mxu0 %v360
  %371 = vmatpush.xpose.msra.mxu0 %v357
  %372 = vmatpush.xpose.msra.mxu0 %v354
  %373 = vmatpush.xpose.msra.mxu0 %v351
  %374 = vmatpush.xpose.msra.mxu0 %v348
  %375 = vmatpush.xpose.msra.mxu0 %v345
  %376 = vmatpush.xpose.msra.mxu0 %v342
  %377 = vmatpush.xpose.msra.mxu0 %v339
  %378 = vmatpush.xpose.msra.mxu0 %v336
  %379 = vmatpush.xpose.msra.mxu0 %v333
  %380 = vmatpush.xpose.msra.mxu0 %v330
  %381 = vmatpush.xpose.msra.mxu0 %v327
  %382 = vmatpush.xpose.msra.mxu0 %v324
  %383 = vmatpush.xpose.msra.mxu0 %v321
  %384 = vmatmul.f32.gmra.mxu0 %v297
  %v385 = vpop.f32.mrf.mxu0
  %v386 = vadd.f32 %v258, %v385
  %387 = vmatmul.f32.gmra.mxu0 %v300
  %v388 = vpop.f32.mrf.mxu0
  %v389 = vadd.f32 %v263, %v388
  %390 = vmatmul.f32.gmra.mxu0 %v303
  %v391 = vpop.f32.mrf.mxu0
  %v392 = vadd.f32 %v268, %v391
  %393 = vmatmul.f32.gmra.mxu0 %v306
  %v394 = vpop.f32.mrf.mxu0
  %v395 = vadd.f32 %v273, %v394
  %396 = vmatmul.f32.gmra.mxu0 %v309
  %v397 = vpop.f32.mrf.mxu0
  %v398 = vadd.f32 %v278, %v397
  %399 = vmatmul.f32.gmra.mxu0 %v312
  %v400 = vpop.f32.mrf.mxu0
  %v401 = vadd.f32 %v283, %v400
  %402 = vmatmul.f32.gmra.mxu0 %v315
  %v403 = vpop.f32.mrf.mxu0
  %v404 = vadd.f32 %v288, %v403
  %405 = vmatmul.f32.gmra.mxu0 %v318
  %v406 = vpop.f32.mrf.mxu0
  %v407 = vadd.f32 %v293, %v406
  %408 = vdwg.mxu0
  %v409 = vld [vmem:[%s6] sm:$0xff]
  %v410 = vld [vmem:[%s6 + $0x8] sm:$0xff]
  %v411 = vld [vmem:[%s6 + $0x10] sm:$0xff]
  %v412 = vld [vmem:[%s6 + $0x18] sm:$0xff]
  %v413 = vld [vmem:[%s6 + $0x20] sm:$0xff]
  %v414 = vld [vmem:[%s6 + $0x28] sm:$0xff]
  %v415 = vld [vmem:[%s6 + $0x30] sm:$0xff]
  %v416 = vld [vmem:[%s6 + $0x38] sm:$0xff]
  %v417 = vld [vmem:[%s7] sm:$0xff]
  %v418 = vld [vmem:[%s7 + $0x8] sm:$0xff]
  %v419 = vld [vmem:[%s7 + $0x10] sm:$0xff]
  %v420 = vld [vmem:[%s7 + $0x18] sm:$0xff]
  %v421 = vld [vmem:[%s7 + $0x20] sm:$0xff]
  %v422 = vld [vmem:[%s7 + $0x28] sm:$0xff]
  %v423 = vld [vmem:[%s7 + $0x30] sm:$0xff]
  %v424 = vld [vmem:[%s7 + $0x38] sm:$0xff]
  %426 = vset.pattern.permute.xlu0 0
  %427 = vperm.xlu0 %426, %v417
  %v428 = vpop.permute.xlu0 %427
  %431 = vset.pattern.permute.xlu0 0
  %432 = vperm.xlu0 %431, %v418
  %v433 = vpop.permute.xlu0 %432
  %436 = vset.pattern.permute.xlu0 0
  %437 = vperm.xlu0 %436, %v419
  %v438 = vpop.permute.xlu0 %437
  %441 = vset.pattern.permute.xlu0 0
  %442 = vperm.xlu0 %441, %v420
  %v443 = vpop.permute.xlu0 %442
  %446 = vset.pattern.permute.xlu0 0
  %447 = vperm.xlu0 %446, %v421
  %v448 = vpop.permute.xlu0 %447
  %451 = vset.pattern.permute.xlu0 0
  %452 = vperm.xlu0 %451, %v422
  %v453 = vpop.permute.xlu0 %452
  %456 = vset.pattern.permute.xlu0 0
  %457 = vperm.xlu0 %456, %v423
  %v458 = vpop.permute.xlu0 %457
  %461 = vset.pattern.permute.xlu0 0
  %462 = vperm.xlu0 %461, %v424
  %v463 = vpop.permute.xlu0 %462
  %vm465 = vcmask 523264
  %v467 = vsel %vm465, %v409, 0
  %v470 = vsel %vm465, %v410, 0
  %v473 = vsel %vm465, %v411, 0
  %v476 = vsel %vm465, %v412, 0
  %v479 = vsel %vm465, %v413, 0
  %v482 = vsel %vm465, %v414, 0
  %v485 = vsel %vm465, %v415, 0
  %v488 = vsel %vm465, %v416, 0
  %490 = vmatpush.msra.mxu0 0.0
  %491 = vmatpush.msra.mxu0 0.0
  %492 = vmatpush.msra.mxu0 0.0
  %493 = vmatpush.msra.mxu0 0.0
  %494 = vmatpush.msra.mxu0 0.0
  %495 = vmatpush.msra.mxu0 0.0
  %496 = vmatpush.msra.mxu0 0.0
  %497 = vmatpush.msra.mxu0 0.0
  %498 = vmatpush.msra.mxu0 %v222
  %499 = vmatpush.msra.mxu0 %v221
  %500 = vmatpush.msra.mxu0 %v220
  %501 = vmatpush.msra.mxu0 %v219
  %502 = vmatpush.msra.mxu0 %v218
  %503 = vmatpush.msra.mxu0 %v217
  %504 = vmatpush.msra.mxu0 %v216
  %505 = vmatpush.msra.mxu0 %v215
  %506 = vmatmul.f32.gmra.mxu0 %v467
  %v507 = vpop.f32.mrf.mxu0
  %v508 = vadd.f32 %v428, %v507
  %509 = vmatmul.f32.gmra.mxu0 %v470
  %v510 = vpop.f32.mrf.mxu0
  %v511 = vadd.f32 %v433, %v510
  %512 = vmatmul.f32.gmra.mxu0 %v473
  %v513 = vpop.f32.mrf.mxu0
  %v514 = vadd.f32 %v438, %v513
  %515 = vmatmul.f32.gmra.mxu0 %v476
  %v516 = vpop.f32.mrf.mxu0
  %v517 = vadd.f32 %v443, %v516
  %518 = vmatmul.f32.gmra.mxu0 %v479
  %v519 = vpop.f32.mrf.mxu0
  %v520 = vadd.f32 %v448, %v519
  %521 = vmatmul.f32.gmra.mxu0 %v482
  %v522 = vpop.f32.mrf.mxu0
  %v523 = vadd.f32 %v453, %v522
  %524 = vmatmul.f32.gmra.mxu0 %v485
  %v525 = vpop.f32.mrf.mxu0
  %v526 = vadd.f32 %v458, %v525
  %527 = vmatmul.f32.gmra.mxu0 %v488
  %v528 = vpop.f32.mrf.mxu0
  %v529 = vadd.f32 %v463, %v528
  %530 = vdwg.mxu0
  %v531 = vmax.f32 %v508, 0.0
  %v532 = vmax.f32 %v511, 0.0
  %v533 = vmax.f32 %v514, 0.0
  %v534 = vmax.f32 %v517, 0.0
  %v535 = vmax.f32 %v520, 0.0
  %v536 = vmax.f32 %v523, 0.0
  %v537 = vmax.f32 %v526, 0.0
  %v538 = vmax.f32 %v529, 0.0
  %v539 = vmul.f32 %v531, %v386
  %v540 = vmul.f32 %v532, %v389
  %v541 = vmul.f32 %v533, %v392
  %v542 = vmul.f32 %v534, %v395
  %v543 = vmul.f32 %v535, %v398
  %v544 = vmul.f32 %v536, %v401
  %v545 = vmul.f32 %v537, %v404
  %v546 = vmul.f32 %v538, %v407
  %v548 = vsel %vm465, 1.0, 0
  %550 = vmatpush.msra.mxu0 0.0
  %551 = vmatpush.msra.mxu0 0.0
  %552 = vmatpush.msra.mxu0 0.0
  %553 = vmatpush.msra.mxu0 0.0
  %554 = vmatpush.msra.mxu0 0.0
  %555 = vmatpush.msra.mxu0 0.0
  %556 = vmatpush.msra.mxu0 0.0
  %557 = vmatpush.msra.mxu0 0.0
  %558 = vmatpush.msra.mxu0 %v546
  %559 = vmatpush.msra.mxu0 %v545
  %560 = vmatpush.msra.mxu0 %v544
  %561 = vmatpush.msra.mxu0 %v543
  %562 = vmatpush.msra.mxu0 %v542
  %563 = vmatpush.msra.mxu0 %v541
  %564 = vmatpush.msra.mxu0 %v540
  %565 = vmatpush.msra.mxu0 %v539
  %566 = vmatmul.f32.gmra.mxu0 %v548
  %v567 = vpop.f32.mrf.mxu0
  %v568 = vadd.f32 0.0, %v567
  %569 = vdwg.mxu0
  %570 = vst [vmem:[%s8] sm:$0x1] %v568
  // Predicated region
  $region34: #{net_forward.1} parent=0 // pred_check
    _
  $region35: #{net_forward.1} parent=0 // pred_check_branch
    %572 = sbr.rel (0) target = $region37
  $region36: #{net_forward.1} parent=0 // pred_region
    _
  $region37: #{net_forward.1} parent=0 // pred_fallthru
    _
  // Predicated region
  $region38: #{net_forward.1} parent=0 // pred_check
    _
  $region39: #{net_forward.1} parent=0 // pred_check_branch
    %574 = sbr.rel (0) target = $region41
  $region40: #{net_forward.1} parent=0 // pred_region
    _
  $region41: #{net_forward.1} parent=0 // pred_fallthru
    _

</llo_original>
